<compile_context>
chip_gen: v6e
topology: v6e:2x2x1
jax: 0.10.0
libtpu: 0.0.40
codegen_flags: <defaults>
</compile_context>

<pallas_src>
import functools

import jax
import jax.numpy as jnp
from jax import lax
from jax.experimental import pallas as pl
from jax.experimental.pallas import tpu as pltpu

# Small hyper-parameters consistent with the module's structure
CLASSES = 2
SAMPLE_CHANNEL = 8      # EEG channels   (module default 30)
SAMPLE_LENGTH = 80      # time samples   (module default 384)
N1 = 8                  # pointwise filters (module default 16)
D = 2                   # depth multiplier
KERNEL_LENGTH = 16      # temporal kernel length (module default 64)
M = D * N1              # depthwise output channels
T_OUT = SAMPLE_LENGTH - KERNEL_LENGTH + 1
BATCH = 4
EPS = 1e-5              # BatchNorm2d default eps

LANE = 128
T_PAD = ((SAMPLE_LENGTH + LANE - 1) // LANE) * LANE   # per-batch padded time


def _cnn_kernel(x_ref, mask_ref, weff_ref, beff_ref, gamma_ref, beta_ref,
                wfc_ref, bfc_ref, out_ref, xcol_ref,
                *, n_batch, t_pad, t_out, k_len, n_chan):
    bct = n_batch * t_pad

    x = x_ref[...]                                        # (C, B*Tp) f32

    # im2col via static lane rotations (XLU): row k*C + c holds x[c, t + k].
    # Rolled slabs go straight into one f32 VMEM buffer at aligned sublane
    # offsets (multiples of C=8).  Wrapped / padded positions only land at
    # columns that are masked below (valid t+k never crosses a batch segment
    # because T <= T_PAD and segments are lane-aligned).
    xcol_ref[0:n_chan, :] = x
    for k in range(1, k_len):
        xcol_ref[k * n_chan:(k + 1) * n_chan, :] = pltpu.roll(
            x, shift=bct - k, axis=1)

    # Fused pointwise+depthwise conv: ONE MXU matmul, bf16 operands, f32 acc.
    conv = jnp.dot(weff_ref[...], xcol_ref[...].astype(jnp.bfloat16),
                   preferred_element_type=jnp.float32) + beff_ref[...]

    # ReLU, then zero padded / invalid time positions with the hoisted mask.
    act = jnp.maximum(conv, 0.0) * mask_ref[...]          # (M, B*Tp) f32

    # Per-batch partial sums over lane-aligned Tp segments.  These ARE the GAP
    # numerators; BN batch statistics are derived from the same partials, so
    # there is no redundant full-width reduction.
    bsums, bsqs = [], []
    for b in range(n_batch):
        seg = act[:, b * t_pad:(b + 1) * t_pad]           # (M, Tp)
        bsums.append(jnp.sum(seg, axis=1, keepdims=True))
        bsqs.append(jnp.sum(seg * seg, axis=1, keepdims=True))
    gap_s = jnp.concatenate(bsums, axis=1)                # (M, B) sum over time
    sq_s = jnp.concatenate(bsqs, axis=1)                  # (M, B)

    # BN batch statistics (biased variance, one-pass).
    count = float(n_batch * t_out)
    mean = jnp.sum(gap_s, axis=1, keepdims=True) * (1.0 / count)   # (M, 1)
    var = jnp.sum(sq_s, axis=1, keepdims=True) * (1.0 / count) - mean * mean
    inv_std = lax.rsqrt(var + EPS)
    scale = inv_std * gamma_ref[...]                      # (M, 1)
    shift = beta_ref[...] - mean * scale                  # (M, 1)

    # GAP commutes with the BN affine.
    gn = gap_s * (1.0 / t_out) * scale + shift            # (M, B)

    # Classifier head for all batches at once; emit (classes, B).
    logits_t = jnp.dot(wfc_ref[...], gn,
                       preferred_element_type=jnp.float32) + bfc_ref[...]
    z = logits_t - jnp.max(logits_t, axis=0, keepdims=True)
    e = jnp.exp(z)
    out_ref[...] = e / jnp.sum(e, axis=0, keepdims=True)


def interpretable_cnn_forward(x, params):
    """x: (B, 1, C, T) float32, mirroring the PyTorch NCHW input."""
    w_pt, b_pt, w_d, b_d, gamma, beta, w_fc, b_fc = params
    B = x.shape[0]
    C, T, K = SAMPLE_CHANNEL, SAMPLE_LENGTH, KERNEL_LENGTH
    Tp, Tout = T_PAD, T_OUT
    assert T <= Tp, "roll/mask invariant: per-batch segments must hold T samples"

    # --- plain-JAX glue: layout & parameter repacking ------------------------
    x_cbt = jnp.transpose(x[:, 0, :, :], (1, 0, 2))          # (C, B, T)
    x_pad = jnp.pad(x_cbt, ((0, 0), (0, 0), (0, Tp - T)))    # (C, B, Tp)
    x_k = x_pad.reshape(C, B * Tp)                           # lane-aligned batches

    # Hoisted time-validity mask (1 where t < Tout within each segment).
    t_idx = jnp.arange(B * Tp) % Tp
    mask = (t_idx < Tout).astype(jnp.float32)[None, :]       # (1, B*Tp)

    w_pt2 = w_pt[:, 0, :, 0]                                 # (N1, C)
    w_pt_exp = jnp.repeat(w_pt2, D, axis=0)                  # (M, C), group m//D
    b_pt_exp = jnp.repeat(b_pt, D)                           # (M,)
    w_d_k = w_d[:, 0, 0, :]                                  # (M, K)
    # Fused conv weights: w_eff[m, k*C + c] = w_d[m,k] * w_pt[m,c]  (bf16 MXU)
    w_eff = (w_d_k[:, :, None] * w_pt_exp[:, None, :]).reshape(M, K * C)
    w_eff_bf = w_eff.astype(jnp.bfloat16)
    # Folded bias: b_eff = b_d + b_pt * sum_k w_d  (f32, added post-matmul)
    b_eff = (b_d + b_pt_exp * jnp.sum(w_d_k, axis=1))[:, None]    # (M, 1)

    gamma_k = gamma[:, None]                                 # (M, 1)
    beta_k = beta[:, None]                                   # (M, 1)
    b_fc_k = b_fc[:, None]                                   # (classes, 1)

    kernel = functools.partial(
        _cnn_kernel, n_batch=B, t_pad=Tp, t_out=Tout, k_len=K, n_chan=C)

    def const_spec(shape):
        return pl.BlockSpec(shape, lambda i, _nd=len(shape): (0,) * _nd)

    out_t = pl.pallas_call(
        kernel,
        out_shape=jax.ShapeDtypeStruct((CLASSES, B), jnp.float32),
        grid=(1,),                                           # single step: no accumulators
        in_specs=[
            const_spec((C, B * Tp)),                         # x (f32)
            const_spec((1, B * Tp)),                         # time mask
            const_spec((M, K * C)),                          # w_eff (bf16)
            const_spec((M, 1)),                              # b_eff
            const_spec((M, 1)),                              # gamma
            const_spec((M, 1)),                              # beta
            const_spec((CLASSES, M)),                        # w_fc
            const_spec((CLASSES, 1)),                        # b_fc
        ],
        out_specs=const_spec((CLASSES, B)),
        scratch_shapes=[pltpu.VMEM((K * C, B * Tp), jnp.float32)],  # im2col buffer
    )(x_k, mask, w_eff_bf, b_eff, gamma_k, beta_k, w_fc_k := w_fc, b_fc_k)

    return out_t.T                                           # (B, classes)


def reference_forward(x, params):
    """Pure-JAX (XLA conv, f32) reference mirroring the PyTorch module exactly."""
    w_pt, b_pt, w_d, b_d, gamma, beta, w_fc, b_fc = params
    dn = ("NCHW", "OIHW", "NCHW")
    p = lax.conv_general_dilated(x, w_pt, (1, 1), "VALID", dimension_numbers=dn)
    p = p + b_pt[None, :, None, None]
    q = lax.conv_general_dilated(p, w_d, (1, 1), "VALID",
                                 dimension_numbers=dn, feature_group_count=N1)
    q = q + b_d[None, :, None, None]
    q = jnp.maximum(q, 0.0)
    mean = jnp.mean(q, axis=(0, 2, 3), keepdims=True)
    var = jnp.mean((q - mean) ** 2, axis=(0, 2, 3), keepdims=True)
    q = (q - mean) / jnp.sqrt(var + EPS)
    q = q * gamma[None, :, None, None] + beta[None, :, None, None]
    g = jnp.mean(q, axis=(2, 3))                             # GAP -> (B, M)
    logits = g @ w_fc.T + b_fc[None, :]
    return jax.nn.softmax(logits, axis=1)


if __name__ == "__main__":
    key = jax.random.PRNGKey(0)
    keys = jax.random.split(key, 9)
    x = jax.random.normal(keys[0], (BATCH, 1, SAMPLE_CHANNEL, SAMPLE_LENGTH),
                          jnp.float32)
    # Deterministic synthetic parameters (shapes match the PyTorch __init__).
    w_pt = 0.3 * jax.random.normal(keys[1], (N1, 1, SAMPLE_CHANNEL, 1), jnp.float32)
    b_pt = 0.1 * jax.random.normal(keys[2], (N1,), jnp.float32)
    w_d = 0.3 * jax.random.normal(keys[3], (M, 1, 1, KERNEL_LENGTH), jnp.float32)
    b_d = 0.1 * jax.random.normal(keys[4], (M,), jnp.float32)
    gamma = 1.0 + 0.1 * jax.random.normal(keys[5], (M,), jnp.float32)
    beta = 0.1 * jax.random.normal(keys[6], (M,), jnp.float32)
    w_fc = 0.3 * jax.random.normal(keys[7], (CLASSES, M), jnp.float32)
    b_fc = 0.1 * jax.random.normal(keys[8], (CLASSES,), jnp.float32)
    params = (w_pt, b_pt, w_d, b_d, gamma, beta, w_fc, b_fc)

    out = jax.block_until_ready(interpretable_cnn_forward(x, params))
    ref = jax.block_until_ready(reference_forward(x, params))

    assert out.shape == (BATCH, CLASSES)
    assert bool(jnp.allclose(jnp.sum(out, axis=1), 1.0, atol=1e-5))
    # Tolerance loosened vs. the f32 reference because the conv MXU operands are
    # bf16 (accumulation stays f32); observed error is ~1e-3 on the probabilities.
    assert bool(jnp.allclose(out, ref, atol=2e-2, rtol=2e-2)), (out, ref)
    print("KERNEL_OK")
</pallas_src>

<mosaic_0001>
module attributes {stable_mosaic.version = 11 : i64} {
  func.func @_cnn_kernel(%arg0: i32, %arg1: memref<8x512xf32, #tpu.memory_space<vmem>>, %arg2: memref<1x512xf32, #tpu.memory_space<vmem>>, %arg3: memref<16x128xbf16, #tpu.memory_space<vmem>>, %arg4: memref<16x1xf32, #tpu.memory_space<vmem>>, %arg5: memref<16x1xf32, #tpu.memory_space<vmem>>, %arg6: memref<16x1xf32, #tpu.memory_space<vmem>>, %arg7: memref<2x16xf32, #tpu.memory_space<vmem>>, %arg8: memref<2x1xf32, #tpu.memory_space<vmem>>, %arg9: memref<2x4xf32, #tpu.memory_space<vmem>>, %arg10: memref<128x512xf32, #tpu.memory_space<vmem>>) attributes {dimension_semantics = [#tpu.dimension_semantics<arbitrary>], iteration_bounds = array<i64: 1>, scalar_prefetch = 0 : i64, scratch_operands = 1 : i64, tpu.core_type = #tpu.core_type<tc>, window_params = [{pipeline_mode = #tpu.pipeline_mode<synchronous>, transform_indices = @transform_0, window_bounds = array<i64: 8, 512>}, {pipeline_mode = #tpu.pipeline_mode<synchronous>, transform_indices = @transform_1, window_bounds = array<i64: 1, 512>}, {pipeline_mode = #tpu.pipeline_mode<synchronous>, transform_indices = @transform_2, window_bounds = array<i64: 16, 128>}, {pipeline_mode = #tpu.pipeline_mode<synchronous>, transform_indices = @transform_3, window_bounds = array<i64: 16, 1>}, {pipeline_mode = #tpu.pipeline_mode<synchronous>, transform_indices = @transform_4, window_bounds = array<i64: 16, 1>}, {pipeline_mode = #tpu.pipeline_mode<synchronous>, transform_indices = @transform_5, window_bounds = array<i64: 16, 1>}, {pipeline_mode = #tpu.pipeline_mode<synchronous>, transform_indices = @transform_6, window_bounds = array<i64: 2, 16>}, {pipeline_mode = #tpu.pipeline_mode<synchronous>, transform_indices = @transform_7, window_bounds = array<i64: 2, 1>}, {pipeline_mode = #tpu.pipeline_mode<synchronous>, transform_indices = @transform_8, window_bounds = array<i64: 2, 4>}]} {
    %c0 = arith.constant 0 : index
    %c0_0 = arith.constant 0 : index
    %0 = vector.load %arg1[%c0, %c0_0] : memref<8x512xf32, #tpu.memory_space<vmem>>, vector<8x512xf32>
    %c0_1 = arith.constant 0 : index
    %c0_2 = arith.constant 0 : index
    %1 = vector.load %arg10[%c0_1, %c0_2] : memref<128x512xf32, #tpu.memory_space<vmem>>, vector<8x512xf32>
    tpu.vector_store %arg10[%c0_1, %c0_2], %0 {strides = array<i32>} : memref<128x512xf32, #tpu.memory_space<vmem>>, vector<8x512xf32>,
    %c511_i32 = arith.constant 511 : i32
    %2 = tpu.dynamic_rotate %0 by %c511_i32 dim 1 : vector<8x512xf32>, i32 -> vector<8x512xf32>
    %c8 = arith.constant 8 : index
    %c0_3 = arith.constant 0 : index
    %3 = vector.load %arg10[%c8, %c0_3] : memref<128x512xf32, #tpu.memory_space<vmem>>, vector<8x512xf32>
    tpu.vector_store %arg10[%c8, %c0_3], %2 {strides = array<i32>} : memref<128x512xf32, #tpu.memory_space<vmem>>, vector<8x512xf32>,
    %c510_i32 = arith.constant 510 : i32
    %4 = tpu.dynamic_rotate %0 by %c510_i32 dim 1 : vector<8x512xf32>, i32 -> vector<8x512xf32>
    %c16 = arith.constant 16 : index
    %c0_4 = arith.constant 0 : index
    %5 = vector.load %arg10[%c16, %c0_4] : memref<128x512xf32, #tpu.memory_space<vmem>>, vector<8x512xf32>
    tpu.vector_store %arg10[%c16, %c0_4], %4 {strides = array<i32>} : memref<128x512xf32, #tpu.memory_space<vmem>>, vector<8x512xf32>,
    %c509_i32 = arith.constant 509 : i32
    %6 = tpu.dynamic_rotate %0 by %c509_i32 dim 1 : vector<8x512xf32>, i32 -> vector<8x512xf32>
    %c24 = arith.constant 24 : index
    %c0_5 = arith.constant 0 : index
    %7 = vector.load %arg10[%c24, %c0_5] : memref<128x512xf32, #tpu.memory_space<vmem>>, vector<8x512xf32>
    tpu.vector_store %arg10[%c24, %c0_5], %6 {strides = array<i32>} : memref<128x512xf32, #tpu.memory_space<vmem>>, vector<8x512xf32>,
    %c508_i32 = arith.constant 508 : i32
    %8 = tpu.dynamic_rotate %0 by %c508_i32 dim 1 : vector<8x512xf32>, i32 -> vector<8x512xf32>
    %c32 = arith.constant 32 : index
    %c0_6 = arith.constant 0 : index
    %9 = vector.load %arg10[%c32, %c0_6] : memref<128x512xf32, #tpu.memory_space<vmem>>, vector<8x512xf32>
    tpu.vector_store %arg10[%c32, %c0_6], %8 {strides = array<i32>} : memref<128x512xf32, #tpu.memory_space<vmem>>, vector<8x512xf32>,
    %c507_i32 = arith.constant 507 : i32
    %10 = tpu.dynamic_rotate %0 by %c507_i32 dim 1 : vector<8x512xf32>, i32 -> vector<8x512xf32>
    %c40 = arith.constant 40 : index
    %c0_7 = arith.constant 0 : index
    %11 = vector.load %arg10[%c40, %c0_7] : memref<128x512xf32, #tpu.memory_space<vmem>>, vector<8x512xf32>
    tpu.vector_store %arg10[%c40, %c0_7], %10 {strides = array<i32>} : memref<128x512xf32, #tpu.memory_space<vmem>>, vector<8x512xf32>,
    %c506_i32 = arith.constant 506 : i32
    %12 = tpu.dynamic_rotate %0 by %c506_i32 dim 1 : vector<8x512xf32>, i32 -> vector<8x512xf32>
    %c48 = arith.constant 48 : index
    %c0_8 = arith.constant 0 : index
    %13 = vector.load %arg10[%c48, %c0_8] : memref<128x512xf32, #tpu.memory_space<vmem>>, vector<8x512xf32>
    tpu.vector_store %arg10[%c48, %c0_8], %12 {strides = array<i32>} : memref<128x512xf32, #tpu.memory_space<vmem>>, vector<8x512xf32>,
    %c505_i32 = arith.constant 505 : i32
    %14 = tpu.dynamic_rotate %0 by %c505_i32 dim 1 : vector<8x512xf32>, i32 -> vector<8x512xf32>
    %c56 = arith.constant 56 : index
    %c0_9 = arith.constant 0 : index
    %15 = vector.load %arg10[%c56, %c0_9] : memref<128x512xf32, #tpu.memory_space<vmem>>, vector<8x512xf32>
    tpu.vector_store %arg10[%c56, %c0_9], %14 {strides = array<i32>} : memref<128x512xf32, #tpu.memory_space<vmem>>, vector<8x512xf32>,
    %c504_i32 = arith.constant 504 : i32
    %16 = tpu.dynamic_rotate %0 by %c504_i32 dim 1 : vector<8x512xf32>, i32 -> vector<8x512xf32>
    %c64 = arith.constant 64 : index
    %c0_10 = arith.constant 0 : index
    %17 = vector.load %arg10[%c64, %c0_10] : memref<128x512xf32, #tpu.memory_space<vmem>>, vector<8x512xf32>
    tpu.vector_store %arg10[%c64, %c0_10], %16 {strides = array<i32>} : memref<128x512xf32, #tpu.memory_space<vmem>>, vector<8x512xf32>,
    %c503_i32 = arith.constant 503 : i32
    %18 = tpu.dynamic_rotate %0 by %c503_i32 dim 1 : vector<8x512xf32>, i32 -> vector<8x512xf32>
    %c72 = arith.constant 72 : index
    %c0_11 = arith.constant 0 : index
    %19 = vector.load %arg10[%c72, %c0_11] : memref<128x512xf32, #tpu.memory_space<vmem>>, vector<8x512xf32>
    tpu.vector_store %arg10[%c72, %c0_11], %18 {strides = array<i32>} : memref<128x512xf32, #tpu.memory_space<vmem>>, vector<8x512xf32>,
    %c502_i32 = arith.constant 502 : i32
    %20 = tpu.dynamic_rotate %0 by %c502_i32 dim 1 : vector<8x512xf32>, i32 -> vector<8x512xf32>
    %c80 = arith.constant 80 : index
    %c0_12 = arith.constant 0 : index
    %21 = vector.load %arg10[%c80, %c0_12] : memref<128x512xf32, #tpu.memory_space<vmem>>, vector<8x512xf32>
    tpu.vector_store %arg10[%c80, %c0_12], %20 {strides = array<i32>} : memref<128x512xf32, #tpu.memory_space<vmem>>, vector<8x512xf32>,
    %c501_i32 = arith.constant 501 : i32
    %22 = tpu.dynamic_rotate %0 by %c501_i32 dim 1 : vector<8x512xf32>, i32 -> vector<8x512xf32>
    %c88 = arith.constant 88 : index
    %c0_13 = arith.constant 0 : index
    %23 = vector.load %arg10[%c88, %c0_13] : memref<128x512xf32, #tpu.memory_space<vmem>>, vector<8x512xf32>
    tpu.vector_store %arg10[%c88, %c0_13], %22 {strides = array<i32>} : memref<128x512xf32, #tpu.memory_space<vmem>>, vector<8x512xf32>,
    %c500_i32 = arith.constant 500 : i32
    %24 = tpu.dynamic_rotate %0 by %c500_i32 dim 1 : vector<8x512xf32>, i32 -> vector<8x512xf32>
    %c96 = arith.constant 96 : index
    %c0_14 = arith.constant 0 : index
    %25 = vector.load %arg10[%c96, %c0_14] : memref<128x512xf32, #tpu.memory_space<vmem>>, vector<8x512xf32>
    tpu.vector_store %arg10[%c96, %c0_14], %24 {strides = array<i32>} : memref<128x512xf32, #tpu.memory_space<vmem>>, vector<8x512xf32>,
    %c499_i32 = arith.constant 499 : i32
    %26 = tpu.dynamic_rotate %0 by %c499_i32 dim 1 : vector<8x512xf32>, i32 -> vector<8x512xf32>
    %c104 = arith.constant 104 : index
    %c0_15 = arith.constant 0 : index
    %27 = vector.load %arg10[%c104, %c0_15] : memref<128x512xf32, #tpu.memory_space<vmem>>, vector<8x512xf32>
    tpu.vector_store %arg10[%c104, %c0_15], %26 {strides = array<i32>} : memref<128x512xf32, #tpu.memory_space<vmem>>, vector<8x512xf32>,
    %c498_i32 = arith.constant 498 : i32
    %28 = tpu.dynamic_rotate %0 by %c498_i32 dim 1 : vector<8x512xf32>, i32 -> vector<8x512xf32>
    %c112 = arith.constant 112 : index
    %c0_16 = arith.constant 0 : index
    %29 = vector.load %arg10[%c112, %c0_16] : memref<128x512xf32, #tpu.memory_space<vmem>>, vector<8x512xf32>
    tpu.vector_store %arg10[%c112, %c0_16], %28 {strides = array<i32>} : memref<128x512xf32, #tpu.memory_space<vmem>>, vector<8x512xf32>,
    %c497_i32 = arith.constant 497 : i32
    %30 = tpu.dynamic_rotate %0 by %c497_i32 dim 1 : vector<8x512xf32>, i32 -> vector<8x512xf32>
    %c120 = arith.constant 120 : index
    %c0_17 = arith.constant 0 : index
    %31 = vector.load %arg10[%c120, %c0_17] : memref<128x512xf32, #tpu.memory_space<vmem>>, vector<8x512xf32>
    tpu.vector_store %arg10[%c120, %c0_17], %30 {strides = array<i32>} : memref<128x512xf32, #tpu.memory_space<vmem>>, vector<8x512xf32>,
    %c0_18 = arith.constant 0 : index
    %c0_19 = arith.constant 0 : index
    %32 = vector.load %arg3[%c0_18, %c0_19] : memref<16x128xbf16, #tpu.memory_space<vmem>>, vector<16x128xbf16>
    %c0_20 = arith.constant 0 : index
    %c0_21 = arith.constant 0 : index
    %33 = vector.load %arg10[%c0_20, %c0_21] : memref<128x512xf32, #tpu.memory_space<vmem>>, vector<128x512xf32>
    %34 = arith.truncf %33 : vector<128x512xf32> to vector<128x512xbf16>
    %cst = arith.constant dense<0.000000e+00> : vector<16x512xf32>
    %35 = tpu.matmul %32, %34, %cst {dimension_numbers = #tpu.dot_dimension_numbers<[1], [0], [0], [1], [0, 0, 1, 1], [], []>} : vector<16x128xbf16>, vector<128x512xbf16>, vector<16x512xf32> -> vector<16x512xf32>
    %c0_22 = arith.constant 0 : index
    %c0_23 = arith.constant 0 : index
    %36 = vector.load %arg4[%c0_22, %c0_23] : memref<16x1xf32, #tpu.memory_space<vmem>>, vector<16x1xf32>
    %37 = vector.broadcast %36 : vector<16x1xf32> to vector<16x512xf32>
    %38 = arith.addf %35, %37 : vector<16x512xf32>
    %cst_24 = arith.constant 0.000000e+00 : f32
    %39 = vector.broadcast %cst_24 : f32 to vector<16x512xf32>
    %40 = arith.maximumf %38, %39 : vector<16x512xf32>
    %c0_25 = arith.constant 0 : index
    %c0_26 = arith.constant 0 : index
    %41 = vector.load %arg2[%c0_25, %c0_26] : memref<1x512xf32, #tpu.memory_space<vmem>>, vector<1x512xf32>
    %42 = vector.broadcast %41 : vector<1x512xf32> to vector<16x512xf32>
    %43 = arith.mulf %40, %42 : vector<16x512xf32>
    %44 = vector.extract_strided_slice %43 {offsets = [0, 0], sizes = [16, 128], strides = [1, 1]} : vector<16x512xf32> to vector<16x128xf32>
    %cst_27 = arith.constant dense<0.000000e+00> : vector<16xf32>
    %45 = vector.multi_reduction <add>, %44, %cst_27 [1] : vector<16x128xf32> to vector<16xf32>
    %46 = vector.shape_cast %45 : vector<16xf32> to vector<16x1xf32>
    %47 = arith.mulf %44, %44 : vector<16x128xf32>
    %cst_28 = arith.constant dense<0.000000e+00> : vector<16xf32>
    %48 = vector.multi_reduction <add>, %47, %cst_28 [1] : vector<16x128xf32> to vector<16xf32>
    %49 = vector.shape_cast %48 : vector<16xf32> to vector<16x1xf32>
    %50 = vector.extract_strided_slice %43 {offsets = [0, 128], sizes = [16, 128], strides = [1, 1]} : vector<16x512xf32> to vector<16x128xf32>
    %cst_29 = arith.constant dense<0.000000e+00> : vector<16xf32>
    %51 = vector.multi_reduction <add>, %50, %cst_29 [1] : vector<16x128xf32> to vector<16xf32>
    %52 = vector.shape_cast %51 : vector<16xf32> to vector<16x1xf32>
    %53 = arith.mulf %50, %50 : vector<16x128xf32>
    %cst_30 = arith.constant dense<0.000000e+00> : vector<16xf32>
    %54 = vector.multi_reduction <add>, %53, %cst_30 [1] : vector<16x128xf32> to vector<16xf32>
    %55 = vector.shape_cast %54 : vector<16xf32> to vector<16x1xf32>
    %56 = vector.extract_strided_slice %43 {offsets = [0, 256], sizes = [16, 128], strides = [1, 1]} : vector<16x512xf32> to vector<16x128xf32>
    %cst_31 = arith.constant dense<0.000000e+00> : vector<16xf32>
    %57 = vector.multi_reduction <add>, %56, %cst_31 [1] : vector<16x128xf32> to vector<16xf32>
    %58 = vector.shape_cast %57 : vector<16xf32> to vector<16x1xf32>
    %59 = arith.mulf %56, %56 : vector<16x128xf32>
    %cst_32 = arith.constant dense<0.000000e+00> : vector<16xf32>
    %60 = vector.multi_reduction <add>, %59, %cst_32 [1] : vector<16x128xf32> to vector<16xf32>
    %61 = vector.shape_cast %60 : vector<16xf32> to vector<16x1xf32>
    %62 = vector.extract_strided_slice %43 {offsets = [0, 384], sizes = [16, 128], strides = [1, 1]} : vector<16x512xf32> to vector<16x128xf32>
    %cst_33 = arith.constant dense<0.000000e+00> : vector<16xf32>
    %63 = vector.multi_reduction <add>, %62, %cst_33 [1] : vector<16x128xf32> to vector<16xf32>
    %64 = vector.shape_cast %63 : vector<16xf32> to vector<16x1xf32>
    %65 = arith.mulf %62, %62 : vector<16x128xf32>
    %cst_34 = arith.constant dense<0.000000e+00> : vector<16xf32>
    %66 = vector.multi_reduction <add>, %65, %cst_34 [1] : vector<16x128xf32> to vector<16xf32>
    %67 = vector.shape_cast %66 : vector<16xf32> to vector<16x1xf32>
    %68 = tpu.concatenate %46, %52, %58, %64 in 1 : vector<16x1xf32>, vector<16x1xf32>, vector<16x1xf32>, vector<16x1xf32> -> vector<16x4xf32>
    %69 = tpu.concatenate %49, %55, %61, %67 in 1 : vector<16x1xf32>, vector<16x1xf32>, vector<16x1xf32>, vector<16x1xf32> -> vector<16x4xf32>
    %cst_35 = arith.constant dense<0.000000e+00> : vector<16xf32>
    %70 = vector.multi_reduction <add>, %68, %cst_35 [1] : vector<16x4xf32> to vector<16xf32>
    %71 = vector.shape_cast %70 : vector<16xf32> to vector<16x1xf32>
    %cst_36 = arith.constant 0.00384615385 : f32
    %72 = vector.broadcast %cst_36 : f32 to vector<16x1xf32>
    %73 = arith.mulf %71, %72 : vector<16x1xf32>
    %cst_37 = arith.constant dense<0.000000e+00> : vector<16xf32>
    %74 = vector.multi_reduction <add>, %69, %cst_37 [1] : vector<16x4xf32> to vector<16xf32>
    %75 = vector.shape_cast %74 : vector<16xf32> to vector<16x1xf32>
    %cst_38 = arith.constant 0.00384615385 : f32
    %76 = vector.broadcast %cst_38 : f32 to vector<16x1xf32>
    %77 = arith.mulf %75, %76 : vector<16x1xf32>
    %78 = arith.mulf %73, %73 : vector<16x1xf32>
    %79 = arith.subf %77, %78 : vector<16x1xf32>
    %cst_39 = arith.constant 9.99999974E-6 : f32
    %80 = vector.broadcast %cst_39 : f32 to vector<16x1xf32>
    %81 = arith.addf %79, %80 : vector<16x1xf32>
    %82 = math.rsqrt %81 : vector<16x1xf32>
    %c0_40 = arith.constant 0 : index
    %c0_41 = arith.constant 0 : index
    %83 = vector.load %arg5[%c0_40, %c0_41] : memref<16x1xf32, #tpu.memory_space<vmem>>, vector<16x1xf32>
    %84 = arith.mulf %82, %83 : vector<16x1xf32>
    %c0_42 = arith.constant 0 : index
    %c0_43 = arith.constant 0 : index
    %85 = vector.load %arg6[%c0_42, %c0_43] : memref<16x1xf32, #tpu.memory_space<vmem>>, vector<16x1xf32>
    %86 = arith.mulf %73, %84 : vector<16x1xf32>
    %87 = arith.subf %85, %86 : vector<16x1xf32>
    %cst_44 = arith.constant 0.0153846154 : f32
    %88 = vector.broadcast %cst_44 : f32 to vector<16x4xf32>
    %89 = arith.mulf %68, %88 : vector<16x4xf32>
    %90 = vector.broadcast %84 : vector<16x1xf32> to vector<16x4xf32>
    %91 = arith.mulf %89, %90 : vector<16x4xf32>
    %92 = vector.broadcast %87 : vector<16x1xf32> to vector<16x4xf32>
    %93 = arith.addf %91, %92 : vector<16x4xf32>
    %c0_45 = arith.constant 0 : index
    %c0_46 = arith.constant 0 : index
    %94 = vector.load %arg7[%c0_45, %c0_46] : memref<2x16xf32, #tpu.memory_space<vmem>>, vector<2x16xf32>
    %cst_47 = arith.constant dense<0.000000e+00> : vector<2x4xf32>
    %95 = tpu.matmul %94, %93, %cst_47 {dimension_numbers = #tpu.dot_dimension_numbers<[1], [0], [0], [1], [0, 0, 1, 1], [], []>} : vector<2x16xf32>, vector<16x4xf32>, vector<2x4xf32> -> vector<2x4xf32>
    %c0_48 = arith.constant 0 : index
    %c0_49 = arith.constant 0 : index
    %96 = vector.load %arg8[%c0_48, %c0_49] : memref<2x1xf32, #tpu.memory_space<vmem>>, vector<2x1xf32>
    %97 = vector.broadcast %96 : vector<2x1xf32> to vector<2x4xf32>
    %98 = arith.addf %95, %97 : vector<2x4xf32>
    %cst_50 = arith.constant dense<0xFF800000> : vector<4xf32>
    %99 = vector.multi_reduction <maximumf>, %98, %cst_50 [0] : vector<2x4xf32> to vector<4xf32>
    %100 = vector.shape_cast %99 : vector<4xf32> to vector<1x4xf32>
    %101 = vector.broadcast %100 : vector<1x4xf32> to vector<2x4xf32>
    %102 = arith.subf %98, %101 : vector<2x4xf32>
    %103 = math.exp %102 : vector<2x4xf32>
    %cst_51 = arith.constant dense<0.000000e+00> : vector<4xf32>
    %104 = vector.multi_reduction <add>, %103, %cst_51 [0] : vector<2x4xf32> to vector<4xf32>
    %105 = vector.shape_cast %104 : vector<4xf32> to vector<1x4xf32>
    %106 = vector.broadcast %105 : vector<1x4xf32> to vector<2x4xf32>
    %107 = arith.divf %103, %106 : vector<2x4xf32>
    %c0_52 = arith.constant 0 : index
    %c0_53 = arith.constant 0 : index
    %108 = vector.load %arg9[%c0_52, %c0_53] : memref<2x4xf32, #tpu.memory_space<vmem>>, vector<2x4xf32>
    tpu.vector_store %arg9[%c0_52, %c0_53], %107 {strides = array<i32>} : memref<2x4xf32, #tpu.memory_space<vmem>>, vector<2x4xf32>,
    return
  }
  func.func @transform_0(%arg0: i32) -> (i32, i32) {
    %c0_i32 = arith.constant 0 : i32
    %c0_i32_0 = arith.constant 0 : i32
    %c0_i32_1 = arith.constant 0 : i32
    return %c0_i32, %c0_i32_0 : i32, i32
  }
  func.func @transform_1(%arg0: i32) -> (i32, i32) {
    %c0_i32 = arith.constant 0 : i32
    %c0_i32_0 = arith.constant 0 : i32
    %c0_i32_1 = arith.constant 0 : i32
    return %c0_i32, %c0_i32_0 : i32, i32
  }
  func.func @transform_2(%arg0: i32) -> (i32, i32) {
    %c0_i32 = arith.constant 0 : i32
    %c0_i32_0 = arith.constant 0 : i32
    %c0_i32_1 = arith.constant 0 : i32
    return %c0_i32, %c0_i32_0 : i32, i32
  }
  func.func @transform_3(%arg0: i32) -> (i32, i32) {
    %c0_i32 = arith.constant 0 : i32
    %c0_i32_0 = arith.constant 0 : i32
    %c0_i32_1 = arith.constant 0 : i32
    return %c0_i32, %c0_i32_0 : i32, i32
  }
  func.func @transform_4(%arg0: i32) -> (i32, i32) {
    %c0_i32 = arith.constant 0 : i32
    %c0_i32_0 = arith.constant 0 : i32
    %c0_i32_1 = arith.constant 0 : i32
    return %c0_i32, %c0_i32_0 : i32, i32
  }
  func.func @transform_5(%arg0: i32) -> (i32, i32) {
    %c0_i32 = arith.constant 0 : i32
    %c0_i32_0 = arith.constant 0 : i32
    %c0_i32_1 = arith.constant 0 : i32
    return %c0_i32, %c0_i32_0 : i32, i32
  }
  func.func @transform_6(%arg0: i32) -> (i32, i32) {
    %c0_i32 = arith.constant 0 : i32
    %c0_i32_0 = arith.constant 0 : i32
    %c0_i32_1 = arith.constant 0 : i32
    return %c0_i32, %c0_i32_0 : i32, i32
  }
  func.func @transform_7(%arg0: i32) -> (i32, i32) {
    %c0_i32 = arith.constant 0 : i32
    %c0_i32_0 = arith.constant 0 : i32
    %c0_i32_1 = arith.constant 0 : i32
    return %c0_i32, %c0_i32_0 : i32, i32
  }
  func.func @transform_8(%arg0: i32) -> (i32, i32) {
    %c0_i32 = arith.constant 0 : i32
    %c0_i32_0 = arith.constant 0 : i32
    %c0_i32_1 = arith.constant 0 : i32
    return %c0_i32, %c0_i32_0 : i32, i32
  }
}

</mosaic_0001>

<llo_original>
// kernel: tpu_custom_call.1
$region0: #{tpu_custom_call.1}
  #allocation0 [shape = 'u32[]', space=smem, size = 0x4, offset = 0x4, fixed_abs, tag = 'smem constant byte address 0x4 - core index']
  #allocation1 [shape = 'u32[144,128]{1,0:T(1,128)}', space=vmem, size = 0x12000, scoped, tag = 'internal scratch']
  #allocation2 [shape = 'f32[128,512]{1,0:T(8,128)}', space=vmem, size = 0x40000, scoped, tag = 'scratch operand']
  %s0 = inlined_call_operand.vmem [shape: f32[8,512], index: 0, kind: input, shape index: {}]
  %s1 = inlined_call_operand.vmem [shape: f32[1,512], index: 1, kind: input, shape index: {}]
  %s2 = inlined_call_operand.vmem [shape: bf16[16,128], index: 2, kind: input, shape index: {}]
  %s3 = inlined_call_operand.vmem [shape: f32[16,1], index: 3, kind: input, shape index: {}]
  %s4 = inlined_call_operand.vmem [shape: f32[16,1], index: 4, kind: input, shape index: {}]
  %s5 = inlined_call_operand.vmem [shape: f32[16,1], index: 5, kind: input, shape index: {}]
  %s6 = inlined_call_operand.vmem [shape: f32[2,16], index: 6, kind: input, shape index: {}]
  %s7 = inlined_call_operand.vmem [shape: f32[2,1], index: 7, kind: input, shape index: {}]
  %s8 = inlined_call_operand.hbm [shape: f32[2,4], index: 8, kind: output, shape index: {}]
  %s9 = sld [smem:[#allocation0]]
  $region42: #{tpu_custom_call.1} parent=0
    _
  %s11 = ssub.s32 1, %s9
  %s12 = scalar_select 0, %s11, %s9
  $region1: #{tpu_custom_call.1} parent=0
    #allocation3 [shape = 'u8[1024]{0}', space=vmem, size = 0x400, scoped, tag = 'output window, operand 0, single buffered']
    #allocation4 [shape = 's32[1]{0}', space=sflag, size = 0x4, scoped, tag = 'scoped memory for tpu_custom_call.1']
    %13 = vsyncpa [#allocation4], 0
    // Predicated region
    $region2: #{tpu_custom_call.1} parent=1 // pred_check
      _
    $region3: #{tpu_custom_call.1} parent=1 // pred_check_branch
      %15 = sbr.rel (0) target = $region5
    $region4: #{tpu_custom_call.1} parent=1 // pred_region
      _
    $region5: #{tpu_custom_call.1} parent=1 // pred_fallthru
      _
    // Predicated region
    $region6: #{tpu_custom_call.1} parent=1 // pred_check
      _
    $region7: #{tpu_custom_call.1} parent=1 // pred_check_branch
      %17 = sbr.rel (0) target = $region9
    $region8: #{tpu_custom_call.1} parent=1 // pred_region
      _
    $region9: #{tpu_custom_call.1} parent=1 // pred_fallthru
      _
    // Predicated region
    $region10: #{tpu_custom_call.1} parent=1 // pred_check
      _
    $region11: #{tpu_custom_call.1} parent=1 // pred_check_branch
      %19 = sbr.rel (0) target = $region13
    $region12: #{tpu_custom_call.1} parent=1 // pred_region
      _
    $region13: #{tpu_custom_call.1} parent=1 // pred_fallthru
      _
    // Predicated region
    $region14: #{tpu_custom_call.1} parent=1 // pred_check
      _
    $region15: #{tpu_custom_call.1} parent=1 // pred_check_branch
      %21 = sbr.rel (0) target = $region17
    $region16: #{tpu_custom_call.1} parent=1 // pred_region
      _
    $region17: #{tpu_custom_call.1} parent=1 // pred_fallthru
      _
    // Predicated region
    $region18: #{tpu_custom_call.1} parent=1 // pred_check
      _
    $region19: #{tpu_custom_call.1} parent=1 // pred_check_branch
      %23 = sbr.rel (0) target = $region21
    $region20: #{tpu_custom_call.1} parent=1 // pred_region
      _
    $region21: #{tpu_custom_call.1} parent=1 // pred_fallthru
      _
    // Predicated region
    $region22: #{tpu_custom_call.1} parent=1 // pred_check
      _
    $region23: #{tpu_custom_call.1} parent=1 // pred_check_branch
      %25 = sbr.rel (0) target = $region25
    $region24: #{tpu_custom_call.1} parent=1 // pred_region
      _
    $region25: #{tpu_custom_call.1} parent=1 // pred_fallthru
      _
    // Predicated region
    $region26: #{tpu_custom_call.1} parent=1 // pred_check
      _
    $region27: #{tpu_custom_call.1} parent=1 // pred_check_branch
      %27 = sbr.rel (0) target = $region29
    $region28: #{tpu_custom_call.1} parent=1 // pred_region
      _
    $region29: #{tpu_custom_call.1} parent=1 // pred_fallthru
      _
    // Predicated region
    $region30: #{tpu_custom_call.1} parent=1 // pred_check
      _
    $region31: #{tpu_custom_call.1} parent=1 // pred_check_branch
      %29 = sbr.rel (0) target = $region33
    $region32: #{tpu_custom_call.1} parent=1 // pred_region
      _
    $region33: #{tpu_custom_call.1} parent=1 // pred_fallthru
      _
    %v31 = vld [vmem:[%s0] sm:$0xff]
    %v32 = vld [vmem:[%s0 + $0x8] sm:$0xff]
    %v33 = vld [vmem:[%s0 + $0x10] sm:$0xff]
    %v34 = vld [vmem:[%s0 + $0x18] sm:$0xff]
    %35 = vst [vmem:[#allocation2] sm:$0xff] %v31
    %36 = vst [vmem:[#allocation2 + $0x8] sm:$0xff] %v32
    %37 = vst [vmem:[#allocation2 + $0x10] sm:$0xff] %v33
    %38 = vst [vmem:[#allocation2 + $0x18] sm:$0xff] %v34
    %39 = vrot.lane.b32.xlu0 %v31, 127
    %v40 = vpop.permute.xlu0 %39
    %41 = vrot.lane.b32.xlu0 %v32, 127
    %v42 = vpop.permute.xlu0 %41
    %43 = vrot.lane.b32.xlu0 %v33, 127
    %v44 = vpop.permute.xlu0 %43
    %45 = vrot.lane.b32.xlu0 %v34, 127
    %v46 = vpop.permute.xlu0 %45
    %v47 = vlaneseq
    %v48 = vand.u32 %v47, 127
    %vm49 = vcmp.lt.s32.totalorder %v48, 127
    %v50 = vsel %vm49, %v44, %v46
    %v51 = vsel %vm49, %v42, %v44
    %v52 = vsel %vm49, %v40, %v42
    %v53 = vsel %vm49, %v46, %v40
    %54 = vst [vmem:[#allocation2 + $0x20] sm:$0xff] %v52
    %55 = vst [vmem:[#allocation2 + $0x28] sm:$0xff] %v51
    %56 = vst [vmem:[#allocation2 + $0x30] sm:$0xff] %v50
    %57 = vst [vmem:[#allocation2 + $0x38] sm:$0xff] %v53
    %58 = vrot.lane.b32.xlu0 %v31, 126
    %v59 = vpop.permute.xlu0 %58
    %60 = vrot.lane.b32.xlu0 %v32, 126
    %v61 = vpop.permute.xlu0 %60
    %62 = vrot.lane.b32.xlu0 %v33, 126
    %v63 = vpop.permute.xlu0 %62
    %64 = vrot.lane.b32.xlu0 %v34, 126
    %v65 = vpop.permute.xlu0 %64
    %vm66 = vcmp.lt.s32.totalorder %v48, 126
    %v67 = vsel %vm66, %v63, %v65
    %v68 = vsel %vm66, %v61, %v63
    %v69 = vsel %vm66, %v59, %v61
    %v70 = vsel %vm66, %v65, %v59
    %71 = vst [vmem:[#allocation2 + $0x40] sm:$0xff] %v69
    %72 = vst [vmem:[#allocation2 + $0x48] sm:$0xff] %v68
    %73 = vst [vmem:[#allocation2 + $0x50] sm:$0xff] %v67
    %74 = vst [vmem:[#allocation2 + $0x58] sm:$0xff] %v70
    %75 = vrot.lane.b32.xlu0 %v31, 125
    %v76 = vpop.permute.xlu0 %75
    %77 = vrot.lane.b32.xlu0 %v32, 125
    %v78 = vpop.permute.xlu0 %77
    %79 = vrot.lane.b32.xlu0 %v33, 125
    %v80 = vpop.permute.xlu0 %79
    %81 = vrot.lane.b32.xlu0 %v34, 125
    %v82 = vpop.permute.xlu0 %81
    %vm83 = vcmp.lt.s32.totalorder %v48, 125
    %v84 = vsel %vm83, %v80, %v82
    %v85 = vsel %vm83, %v78, %v80
    %v86 = vsel %vm83, %v76, %v78
    %v87 = vsel %vm83, %v82, %v76
    %88 = vst [vmem:[#allocation2 + $0x60] sm:$0xff] %v86
    %89 = vst [vmem:[#allocation2 + $0x68] sm:$0xff] %v85
    %90 = vst [vmem:[#allocation2 + $0x70] sm:$0xff] %v84
    %91 = vst [vmem:[#allocation2 + $0x78] sm:$0xff] %v87
    %92 = vrot.lane.b32.xlu0 %v31, 124
    %v93 = vpop.permute.xlu0 %92
    %94 = vrot.lane.b32.xlu0 %v32, 124
    %v95 = vpop.permute.xlu0 %94
    %96 = vrot.lane.b32.xlu0 %v33, 124
    %v97 = vpop.permute.xlu0 %96
    %98 = vrot.lane.b32.xlu0 %v34, 124
    %v99 = vpop.permute.xlu0 %98
    %vm100 = vcmp.lt.s32.totalorder %v48, 124
    %v101 = vsel %vm100, %v97, %v99
    %v102 = vsel %vm100, %v95, %v97
    %v103 = vsel %vm100, %v93, %v95
    %v104 = vsel %vm100, %v99, %v93
    %105 = vst [vmem:[#allocation2 + $0x80] sm:$0xff] %v103
    %106 = vst [vmem:[#allocation2 + $0x88] sm:$0xff] %v102
    %107 = vst [vmem:[#allocation2 + $0x90] sm:$0xff] %v101
    %108 = vst [vmem:[#allocation2 + $0x98] sm:$0xff] %v104
    %109 = vrot.lane.b32.xlu0 %v31, 123
    %v110 = vpop.permute.xlu0 %109
    %111 = vrot.lane.b32.xlu0 %v32, 123
    %v112 = vpop.permute.xlu0 %111
    %113 = vrot.lane.b32.xlu0 %v33, 123
    %v114 = vpop.permute.xlu0 %113
    %115 = vrot.lane.b32.xlu0 %v34, 123
    %v116 = vpop.permute.xlu0 %115
    %vm117 = vcmp.lt.s32.totalorder %v48, 123
    %v118 = vsel %vm117, %v114, %v116
    %v119 = vsel %vm117, %v112, %v114
    %v120 = vsel %vm117, %v110, %v112
    %v121 = vsel %vm117, %v116, %v110
    %122 = vst [vmem:[#allocation2 + $0xa0] sm:$0xff] %v120
    %123 = vst [vmem:[#allocation2 + $0xa8] sm:$0xff] %v119
    %124 = vst [vmem:[#allocation2 + $0xb0] sm:$0xff] %v118
    %125 = vst [vmem:[#allocation2 + $0xb8] sm:$0xff] %v121
    %126 = vrot.lane.b32.xlu0 %v31, 122
    %v127 = vpop.permute.xlu0 %126
    %128 = vrot.lane.b32.xlu0 %v32, 122
    %v129 = vpop.permute.xlu0 %128
    %130 = vrot.lane.b32.xlu0 %v33, 122
    %v131 = vpop.permute.xlu0 %130
    %132 = vrot.lane.b32.xlu0 %v34, 122
    %v133 = vpop.permute.xlu0 %132
    %vm134 = vcmp.lt.s32.totalorder %v48, 122
    %v135 = vsel %vm134, %v131, %v133
    %v136 = vsel %vm134, %v129, %v131
    %v137 = vsel %vm134, %v127, %v129
    %v138 = vsel %vm134, %v133, %v127
    %139 = vst [vmem:[#allocation2 + $0xc0] sm:$0xff] %v137
    %140 = vst [vmem:[#allocation2 + $0xc8] sm:$0xff] %v136
    %141 = vst [vmem:[#allocation2 + $0xd0] sm:$0xff] %v135
    %142 = vst [vmem:[#allocation2 + $0xd8] sm:$0xff] %v138
    %143 = vrot.lane.b32.xlu0 %v31, 121
    %v144 = vpop.permute.xlu0 %143
    %145 = vrot.lane.b32.xlu0 %v32, 121
    %v146 = vpop.permute.xlu0 %145
    %147 = vrot.lane.b32.xlu0 %v33, 121
    %v148 = vpop.permute.xlu0 %147
    %149 = vrot.lane.b32.xlu0 %v34, 121
    %v150 = vpop.permute.xlu0 %149
    %vm151 = vcmp.lt.s32.totalorder %v48, 121
    %v152 = vsel %vm151, %v148, %v150
    %v153 = vsel %vm151, %v146, %v148
    %v154 = vsel %vm151, %v144, %v146
    %v155 = vsel %vm151, %v150, %v144
    %156 = vst [vmem:[#allocation2 + $0xe0] sm:$0xff] %v154
    %157 = vst [vmem:[#allocation2 + $0xe8] sm:$0xff] %v153
    %158 = vst [vmem:[#allocation2 + $0xf0] sm:$0xff] %v152
    %159 = vst [vmem:[#allocation2 + $0xf8] sm:$0xff] %v155
    %160 = vrot.lane.b32.xlu0 %v31, 120
    %v161 = vpop.permute.xlu0 %160
    %162 = vrot.lane.b32.xlu0 %v32, 120
    %v163 = vpop.permute.xlu0 %162
    %164 = vrot.lane.b32.xlu0 %v33, 120
    %v165 = vpop.permute.xlu0 %164
    %166 = vrot.lane.b32.xlu0 %v34, 120
    %v167 = vpop.permute.xlu0 %166
    %vm168 = vcmp.lt.s32.totalorder %v48, 120
    %v169 = vsel %vm168, %v165, %v167
    %v170 = vsel %vm168, %v163, %v165
    %v171 = vsel %vm168, %v161, %v163
    %v172 = vsel %vm168, %v167, %v161
    %173 = vst [vmem:[#allocation2 + $0x100] sm:$0xff] %v171
    %174 = vst [vmem:[#allocation2 + $0x108] sm:$0xff] %v170
    %175 = vst [vmem:[#allocation2 + $0x110] sm:$0xff] %v169
    %176 = vst [vmem:[#allocation2 + $0x118] sm:$0xff] %v172
    %177 = vrot.lane.b32.xlu0 %v31, 119
    %v178 = vpop.permute.xlu0 %177
    %179 = vrot.lane.b32.xlu0 %v32, 119
    %v180 = vpop.permute.xlu0 %179
    %181 = vrot.lane.b32.xlu0 %v33, 119
    %v182 = vpop.permute.xlu0 %181
    %183 = vrot.lane.b32.xlu0 %v34, 119
    %v184 = vpop.permute.xlu0 %183
    %vm185 = vcmp.lt.s32.totalorder %v48, 119
    %v186 = vsel %vm185, %v182, %v184
    %v187 = vsel %vm185, %v180, %v182
    %v188 = vsel %vm185, %v178, %v180
    %v189 = vsel %vm185, %v184, %v178
    %190 = vst [vmem:[#allocation2 + $0x120] sm:$0xff] %v188
    %191 = vst [vmem:[#allocation2 + $0x128] sm:$0xff] %v187
    %192 = vst [vmem:[#allocation2 + $0x130] sm:$0xff] %v186
    %193 = vst [vmem:[#allocation2 + $0x138] sm:$0xff] %v189
    %194 = vrot.lane.b32.xlu0 %v31, 118
    %v195 = vpop.permute.xlu0 %194
    %196 = vrot.lane.b32.xlu0 %v32, 118
    %v197 = vpop.permute.xlu0 %196
    %198 = vrot.lane.b32.xlu0 %v33, 118
    %v199 = vpop.permute.xlu0 %198
    %200 = vrot.lane.b32.xlu0 %v34, 118
    %v201 = vpop.permute.xlu0 %200
    %vm202 = vcmp.lt.s32.totalorder %v48, 118
    %v203 = vsel %vm202, %v199, %v201
    %v204 = vsel %vm202, %v197, %v199
    %v205 = vsel %vm202, %v195, %v197
    %v206 = vsel %vm202, %v201, %v195
    %207 = vst [vmem:[#allocation2 + $0x140] sm:$0xff] %v205
    %208 = vst [vmem:[#allocation2 + $0x148] sm:$0xff] %v204
    %209 = vst [vmem:[#allocation2 + $0x150] sm:$0xff] %v203
    %210 = vst [vmem:[#allocation2 + $0x158] sm:$0xff] %v206
    %211 = vrot.lane.b32.xlu0 %v31, 117
    %v212 = vpop.permute.xlu0 %211
    %213 = vrot.lane.b32.xlu0 %v32, 117
    %v214 = vpop.permute.xlu0 %213
    %215 = vrot.lane.b32.xlu0 %v33, 117
    %v216 = vpop.permute.xlu0 %215
    %217 = vrot.lane.b32.xlu0 %v34, 117
    %v218 = vpop.permute.xlu0 %217
    %vm219 = vcmp.lt.s32.totalorder %v48, 117
    %v220 = vsel %vm219, %v216, %v218
    %v221 = vsel %vm219, %v214, %v216
    %v222 = vsel %vm219, %v212, %v214
    %v223 = vsel %vm219, %v218, %v212
    %224 = vst [vmem:[#allocation2 + $0x160] sm:$0xff] %v222
    %225 = vst [vmem:[#allocation2 + $0x168] sm:$0xff] %v221
    %226 = vst [vmem:[#allocation2 + $0x170] sm:$0xff] %v220
    %227 = vst [vmem:[#allocation2 + $0x178] sm:$0xff] %v223
    %228 = vrot.lane.b32.xlu0 %v31, 116
    %v229 = vpop.permute.xlu0 %228
    %230 = vrot.lane.b32.xlu0 %v32, 116
    %v231 = vpop.permute.xlu0 %230
    %232 = vrot.lane.b32.xlu0 %v33, 116
    %v233 = vpop.permute.xlu0 %232
    %234 = vrot.lane.b32.xlu0 %v34, 116
    %v235 = vpop.permute.xlu0 %234
    %vm236 = vcmp.lt.s32.totalorder %v48, 116
    %v237 = vsel %vm236, %v233, %v235
    %v238 = vsel %vm236, %v231, %v233
    %v239 = vsel %vm236, %v229, %v231
    %v240 = vsel %vm236, %v235, %v229
    %241 = vst [vmem:[#allocation2 + $0x180] sm:$0xff] %v239
    %242 = vst [vmem:[#allocation2 + $0x188] sm:$0xff] %v238
    %243 = vst [vmem:[#allocation2 + $0x190] sm:$0xff] %v237
    %244 = vst [vmem:[#allocation2 + $0x198] sm:$0xff] %v240
    %245 = vrot.lane.b32.xlu0 %v31, 115
    %v246 = vpop.permute.xlu0 %245
    %247 = vrot.lane.b32.xlu0 %v32, 115
    %v248 = vpop.permute.xlu0 %247
    %249 = vrot.lane.b32.xlu0 %v33, 115
    %v250 = vpop.permute.xlu0 %249
    %251 = vrot.lane.b32.xlu0 %v34, 115
    %v252 = vpop.permute.xlu0 %251
    %vm253 = vcmp.lt.s32.totalorder %v48, 115
    %v254 = vsel %vm253, %v250, %v252
    %v255 = vsel %vm253, %v248, %v250
    %v256 = vsel %vm253, %v246, %v248
    %v257 = vsel %vm253, %v252, %v246
    %258 = vst [vmem:[#allocation2 + $0x1a0] sm:$0xff] %v256
    %259 = vst [vmem:[#allocation2 + $0x1a8] sm:$0xff] %v255
    %260 = vst [vmem:[#allocation2 + $0x1b0] sm:$0xff] %v254
    %261 = vst [vmem:[#allocation2 + $0x1b8] sm:$0xff] %v257
    %262 = vrot.lane.b32.xlu0 %v31, 114
    %v263 = vpop.permute.xlu0 %262
    %264 = vrot.lane.b32.xlu0 %v32, 114
    %v265 = vpop.permute.xlu0 %264
    %266 = vrot.lane.b32.xlu0 %v33, 114
    %v267 = vpop.permute.xlu0 %266
    %268 = vrot.lane.b32.xlu0 %v34, 114
    %v269 = vpop.permute.xlu0 %268
    %vm270 = vcmp.lt.s32.totalorder %v48, 114
    %v271 = vsel %vm270, %v267, %v269
    %v272 = vsel %vm270, %v265, %v267
    %v273 = vsel %vm270, %v263, %v265
    %v274 = vsel %vm270, %v269, %v263
    %275 = vst [vmem:[#allocation2 + $0x1c0] sm:$0xff] %v273
    %276 = vst [vmem:[#allocation2 + $0x1c8] sm:$0xff] %v272
    %277 = vst [vmem:[#allocation2 + $0x1d0] sm:$0xff] %v271
    %278 = vst [vmem:[#allocation2 + $0x1d8] sm:$0xff] %v274
    %279 = vrot.lane.b32.xlu0 %v31, 113
    %v280 = vpop.permute.xlu0 %279
    %281 = vrot.lane.b32.xlu0 %v32, 113
    %v282 = vpop.permute.xlu0 %281
    %283 = vrot.lane.b32.xlu0 %v33, 113
    %v284 = vpop.permute.xlu0 %283
    %285 = vrot.lane.b32.xlu0 %v34, 113
    %v286 = vpop.permute.xlu0 %285
    %vm287 = vcmp.lt.s32.totalorder %v48, 113
    %v288 = vsel %vm287, %v284, %v286
    %v289 = vsel %vm287, %v282, %v284
    %v290 = vsel %vm287, %v280, %v282
    %v291 = vsel %vm287, %v286, %v280
    %292 = vst [vmem:[#allocation2 + $0x1e0] sm:$0xff] %v290
    %293 = vst [vmem:[#allocation2 + $0x1e8] sm:$0xff] %v289
    %294 = vst [vmem:[#allocation2 + $0x1f0] sm:$0xff] %v288
    %295 = vst [vmem:[#allocation2 + $0x1f8] sm:$0xff] %v291
    %v296 = vld [vmem:[%s2] sm:$0xf]
    %v297 = vld [vmem:[%s2 + $0x4] sm:$0xf]
    %v298 = vld [vmem:[#allocation2] sm:$0xff]
    %v299 = vld [vmem:[#allocation2 + $0x8] sm:$0xff]
    %v300 = vld [vmem:[#allocation2 + $0x10] sm:$0xff]
    %v301 = vld [vmem:[#allocation2 + $0x18] sm:$0xff]
    %v302 = vld [vmem:[#allocation2 + $0x20] sm:$0xff]
    %v303 = vld [vmem:[#allocation2 + $0x28] sm:$0xff]
    %v304 = vld [vmem:[#allocation2 + $0x30] sm:$0xff]
    %v305 = vld [vmem:[#allocation2 + $0x38] sm:$0xff]
    %v306 = vld [vmem:[#allocation2 + $0x40] sm:$0xff]
    %v307 = vld [vmem:[#allocation2 + $0x48] sm:$0xff]
    %v308 = vld [vmem:[#allocation2 + $0x50] sm:$0xff]
    %v309 = vld [vmem:[#allocation2 + $0x58] sm:$0xff]
    %v310 = vld [vmem:[#allocation2 + $0x60] sm:$0xff]
    %v311 = vld [vmem:[#allocation2 + $0x68] sm:$0xff]
    %v312 = vld [vmem:[#allocation2 + $0x70] sm:$0xff]
    %v313 = vld [vmem:[#allocation2 + $0x78] sm:$0xff]
    %v314 = vld [vmem:[#allocation2 + $0x80] sm:$0xff]
    %v315 = vld [vmem:[#allocation2 + $0x88] sm:$0xff]
    %v316 = vld [vmem:[#allocation2 + $0x90] sm:$0xff]
    %v317 = vld [vmem:[#allocation2 + $0x98] sm:$0xff]
    %v318 = vld [vmem:[#allocation2 + $0xa0] sm:$0xff]
    %v319 = vld [vmem:[#allocation2 + $0xa8] sm:$0xff]
    %v320 = vld [vmem:[#allocation2 + $0xb0] sm:$0xff]
    %v321 = vld [vmem:[#allocation2 + $0xb8] sm:$0xff]
    %v322 = vld [vmem:[#allocation2 + $0xc0] sm:$0xff]
    %v323 = vld [vmem:[#allocation2 + $0xc8] sm:$0xff]
    %v324 = vld [vmem:[#allocation2 + $0xd0] sm:$0xff]
    %v325 = vld [vmem:[#allocation2 + $0xd8] sm:$0xff]
    %v326 = vld [vmem:[#allocation2 + $0xe0] sm:$0xff]
    %v327 = vld [vmem:[#allocation2 + $0xe8] sm:$0xff]
    %v328 = vld [vmem:[#allocation2 + $0xf0] sm:$0xff]
    %v329 = vld [vmem:[#allocation2 + $0xf8] sm:$0xff]
    %v330 = vld [vmem:[#allocation2 + $0x100] sm:$0xff]
    %v331 = vld [vmem:[#allocation2 + $0x108] sm:$0xff]
    %v332 = vld [vmem:[#allocation2 + $0x110] sm:$0xff]
    %v333 = vld [vmem:[#allocation2 + $0x118] sm:$0xff]
    %v334 = vld [vmem:[#allocation2 + $0x120] sm:$0xff]
    %v335 = vld [vmem:[#allocation2 + $0x128] sm:$0xff]
    %v336 = vld [vmem:[#allocation2 + $0x130] sm:$0xff]
    %v337 = vld [vmem:[#allocation2 + $0x138] sm:$0xff]
    %v338 = vld [vmem:[#allocation2 + $0x140] sm:$0xff]
    %v339 = vld [vmem:[#allocation2 + $0x148] sm:$0xff]
    %v340 = vld [vmem:[#allocation2 + $0x150] sm:$0xff]
    %v341 = vld [vmem:[#allocation2 + $0x158] sm:$0xff]
    %v342 = vld [vmem:[#allocation2 + $0x160] sm:$0xff]
    %v343 = vld [vmem:[#allocation2 + $0x168] sm:$0xff]
    %v344 = vld [vmem:[#allocation2 + $0x170] sm:$0xff]
    %v345 = vld [vmem:[#allocation2 + $0x178] sm:$0xff]
    %v346 = vld [vmem:[#allocation2 + $0x180] sm:$0xff]
    %v347 = vld [vmem:[#allocation2 + $0x188] sm:$0xff]
    %v348 = vld [vmem:[#allocation2 + $0x190] sm:$0xff]
    %v349 = vld [vmem:[#allocation2 + $0x198] sm:$0xff]
    %v350 = vld [vmem:[#allocation2 + $0x1a0] sm:$0xff]
    %v351 = vld [vmem:[#allocation2 + $0x1a8] sm:$0xff]
    %v352 = vld [vmem:[#allocation2 + $0x1b0] sm:$0xff]
    %v353 = vld [vmem:[#allocation2 + $0x1b8] sm:$0xff]
    %v354 = vld [vmem:[#allocation2 + $0x1c0] sm:$0xff]
    %v355 = vld [vmem:[#allocation2 + $0x1c8] sm:$0xff]
    %v356 = vld [vmem:[#allocation2 + $0x1d0] sm:$0xff]
    %v357 = vld [vmem:[#allocation2 + $0x1d8] sm:$0xff]
    %v358 = vld [vmem:[#allocation2 + $0x1e0] sm:$0xff]
    %v359 = vld [vmem:[#allocation2 + $0x1e8] sm:$0xff]
    %v360 = vld [vmem:[#allocation2 + $0x1f0] sm:$0xff]
    %v361 = vld [vmem:[#allocation2 + $0x1f8] sm:$0xff]
    %v362 = vpack.c.bf16 %v302, %v298
    %v363 = vpack.c.bf16 %v303, %v299
    %v364 = vpack.c.bf16 %v304, %v300
    %v365 = vpack.c.bf16 %v305, %v301
    %v366 = vpack.c.bf16 %v310, %v306
    %v367 = vpack.c.bf16 %v311, %v307
    %v368 = vpack.c.bf16 %v312, %v308
    %v369 = vpack.c.bf16 %v313, %v309
    %v370 = vpack.c.bf16 %v318, %v314
    %v371 = vpack.c.bf16 %v319, %v315
    %v372 = vpack.c.bf16 %v320, %v316
    %v373 = vpack.c.bf16 %v321, %v317
    %v374 = vpack.c.bf16 %v326, %v322
    %v375 = vpack.c.bf16 %v327, %v323
    %v376 = vpack.c.bf16 %v328, %v324
    %v377 = vpack.c.bf16 %v329, %v325
    %v378 = vpack.c.bf16 %v334, %v330
    %v379 = vpack.c.bf16 %v335, %v331
    %v380 = vpack.c.bf16 %v336, %v332
    %v381 = vpack.c.bf16 %v337, %v333
    %v382 = vpack.c.bf16 %v342, %v338
    %v383 = vpack.c.bf16 %v343, %v339
    %v384 = vpack.c.bf16 %v344, %v340
    %v385 = vpack.c.bf16 %v345, %v341
    %v386 = vpack.c.bf16 %v350, %v346
    %v387 = vpack.c.bf16 %v351, %v347
    %v388 = vpack.c.bf16 %v352, %v348
    %v389 = vpack.c.bf16 %v353, %v349
    %v390 = vpack.c.bf16 %v358, %v354
    %v391 = vpack.c.bf16 %v359, %v355
    %v392 = vpack.c.bf16 %v360, %v356
    %v393 = vpack.c.bf16 %v361, %v357
    %v394 = vld [vmem:[%s3] sm:$0xff]
    %v395 = vld [vmem:[%s3 + $0x8] sm:$0xff]
    %397 = vset.pattern.permute.xlu0 0
    %398 = vperm.xlu0 %397, %v394
    %v399 = vpop.permute.xlu0 %398
    %402 = vset.pattern.permute.xlu0 0
    %403 = vperm.xlu0 %402, %v395
    %v404 = vpop.permute.xlu0 %403
    %v408 = vunpack.c.l.b16 %v296
    %v409 = vunpack.c.l.b16 %v297
    %v410 = vpack.c.b16 %v409, %v408
    %412 = vmatprep.subr.bf16.mxu0 %v391
    %413 = vmatpush1.bf16.msra.mxu0 %v390
    %414 = vmatprep.subr.bf16.mxu0 %v387
    %415 = vmatpush1.bf16.msra.mxu0 %v386
    %416 = vmatprep.subr.bf16.mxu0 %v383
    %417 = vmatpush1.bf16.msra.mxu0 %v382
    %418 = vmatprep.subr.bf16.mxu0 %v379
    %419 = vmatpush1.bf16.msra.mxu0 %v378
    %420 = vmatprep.subr.bf16.mxu0 %v375
    %421 = vmatpush1.bf16.msra.mxu0 %v374
    %422 = vmatprep.subr.bf16.mxu0 %v371
    %423 = vmatpush1.bf16.msra.mxu0 %v370
    %424 = vmatprep.subr.bf16.mxu0 %v367
    %425 = vmatpush1.bf16.msra.mxu0 %v366
    %426 = vmatprep.subr.bf16.mxu0 %v363
    %427 = vmatpush1.bf16.msra.mxu0 %v362
    %428 = vmatprep.subr.bf16.mxu0 0
    %429 = vmatpush2.bf16.msra.mxu0 0
    %430 = vmatprep.subr.bf16.mxu0 0
    %431 = vmatpush2.bf16.msra.mxu0 0
    %432 = vmatprep.subr.bf16.mxu0 0
    %433 = vmatpush2.bf16.msra.mxu0 0
    %434 = vmatprep.subr.bf16.mxu0 0
    %435 = vmatpush2.bf16.msra.mxu0 0
    %436 = vmatprep.subr.bf16.mxu0 0
    %437 = vmatpush2.bf16.msra.mxu0 0
    %438 = vmatprep.subr.bf16.mxu0 0
    %439 = vmatpush2.bf16.msra.mxu0 0
    %440 = vmatprep.subr.bf16.mxu0 0
    %441 = vmatpush2.bf16.msra.mxu0 0
    %442 = vmatprep.subr.bf16.mxu0 0
    %443 = vmatpush2.bf16.msra.mxu0 0
    %444 = vmatprep.mubr.bf16.mxu0 0
    %445 = vmatmul.mubr.bf16.gmra.mxu0 %v410
    %v446 = vpop.f32.mrf.mxu0
    %v447 = vadd.f32 %v399, %v446
    %v448 = vpop.f32.mrf.mxu0
    %v449 = vadd.f32 %v399, %v448
    %v450 = vpop.f32.mrf.mxu0
    %v451 = vadd.f32 %v404, %v450
    %v452 = vpop.f32.mrf.mxu0
    %v453 = vadd.f32 %v404, %v452
    %454 = vdwg.mxu0
    %455 = vmatprep.subr.bf16.mxu0 %v393
    %456 = vmatpush1.bf16.msra.mxu0 %v392
    %457 = vmatprep.subr.bf16.mxu0 %v389
    %458 = vmatpush1.bf16.msra.mxu0 %v388
    %459 = vmatprep.subr.bf16.mxu0 %v385
    %460 = vmatpush1.bf16.msra.mxu0 %v384
    %461 = vmatprep.subr.bf16.mxu0 %v381
    %462 = vmatpush1.bf16.msra.mxu0 %v380
    %463 = vmatprep.subr.bf16.mxu0 %v377
    %464 = vmatpush1.bf16.msra.mxu0 %v376
    %465 = vmatprep.subr.bf16.mxu0 %v373
    %466 = vmatpush1.bf16.msra.mxu0 %v372
    %467 = vmatprep.subr.bf16.mxu0 %v369
    %468 = vmatpush1.bf16.msra.mxu0 %v368
    %469 = vmatprep.subr.bf16.mxu0 %v365
    %470 = vmatpush1.bf16.msra.mxu0 %v364
    %471 = vmatprep.subr.bf16.mxu0 0
    %472 = vmatpush2.bf16.msra.mxu0 0
    %473 = vmatprep.subr.bf16.mxu0 0
    %474 = vmatpush2.bf16.msra.mxu0 0
    %475 = vmatprep.subr.bf16.mxu0 0
    %476 = vmatpush2.bf16.msra.mxu0 0
    %477 = vmatprep.subr.bf16.mxu0 0
    %478 = vmatpush2.bf16.msra.mxu0 0
    %479 = vmatprep.subr.bf16.mxu0 0
    %480 = vmatpush2.bf16.msra.mxu0 0
    %481 = vmatprep.subr.bf16.mxu0 0
    %482 = vmatpush2.bf16.msra.mxu0 0
    %483 = vmatprep.subr.bf16.mxu0 0
    %484 = vmatpush2.bf16.msra.mxu0 0
    %485 = vmatprep.subr.bf16.mxu0 0
    %486 = vmatpush2.bf16.msra.mxu0 0
    %487 = vmatprep.mubr.bf16.mxu0 0
    %488 = vmatmul.mubr.bf16.gmra.mxu0 %v410
    %v489 = vpop.f32.mrf.mxu0
    %v490 = vadd.f32 %v399, %v489
    %v491 = vpop.f32.mrf.mxu0
    %v492 = vadd.f32 %v399, %v491
    %v493 = vpop.f32.mrf.mxu0
    %v494 = vadd.f32 %v404, %v493
    %v495 = vpop.f32.mrf.mxu0
    %v496 = vadd.f32 %v404, %v495
    %497 = vdwg.mxu0
    %v498 = vmax.f32 %v447, 0.0
    %v499 = vmax.f32 %v449, 0.0
    %v500 = vmax.f32 %v490, 0.0
    %v501 = vmax.f32 %v492, 0.0
    %v502 = vmax.f32 %v451, 0.0
    %v503 = vmax.f32 %v453, 0.0
    %v504 = vmax.f32 %v494, 0.0
    %v505 = vmax.f32 %v496, 0.0
    %v506 = vld [vmem:[%s1] sm:$0xf]
    %v508 = vlaneseq
    %v509 = vshrl.u32 %v508, 7
    %v510 = vsub.s32 0, %v509
    %v511 = vrot.slane %v506, %v510
    %v512 = vlaneseq
    %v513 = vshrl.u32 %v512, 7
    %v514 = vsub.s32 1, %v513
    %v515 = vrot.slane %v506, %v514
    %v516 = vlaneseq
    %v517 = vshrl.u32 %v516, 7
    %v518 = vsub.s32 2, %v517
    %v519 = vrot.slane %v506, %v518
    %v520 = vlaneseq
    %v521 = vshrl.u32 %v520, 7
    %v522 = vsub.s32 3, %v521
    %v523 = vrot.slane %v506, %v522
    %v528 = vmul.f32 %v498, %v511
    %v529 = vmul.f32 %v499, %v515
    %v530 = vmul.f32 %v500, %v519
    %v531 = vmul.f32 %v501, %v523
    %v532 = vmul.f32 %v502, %v511
    %v533 = vmul.f32 %v503, %v515
    %v534 = vmul.f32 %v504, %v519
    %v535 = vmul.f32 %v505, %v523
    %536 = vadd.xlane.f32.xlu0 %v528
    %v537 = vpop.xlane.xlu0 %536
    %538 = vadd.xlane.f32.xlu0 %v532
    %v539 = vpop.xlane.xlu0 %538
    %v540 = vmul.f32 %v528, %v528
    %v541 = vmul.f32 %v532, %v532
    %542 = vadd.xlane.f32.xlu0 %v540
    %v543 = vpop.xlane.xlu0 %542
    %544 = vadd.xlane.f32.xlu0 %v541
    %v545 = vpop.xlane.xlu0 %544
    %546 = vadd.xlane.f32.xlu0 %v529
    %v547 = vpop.xlane.xlu0 %546
    %548 = vadd.xlane.f32.xlu0 %v533
    %v549 = vpop.xlane.xlu0 %548
    %v550 = vmul.f32 %v529, %v529
    %v551 = vmul.f32 %v533, %v533
    %552 = vadd.xlane.f32.xlu0 %v550
    %v553 = vpop.xlane.xlu0 %552
    %554 = vadd.xlane.f32.xlu0 %v551
    %v555 = vpop.xlane.xlu0 %554
    %556 = vadd.xlane.f32.xlu0 %v530
    %v557 = vpop.xlane.xlu0 %556
    %558 = vadd.xlane.f32.xlu0 %v534
    %v559 = vpop.xlane.xlu0 %558
    %v560 = vmul.f32 %v530, %v530
    %v561 = vmul.f32 %v534, %v534
    %562 = vadd.xlane.f32.xlu0 %v560
    %v563 = vpop.xlane.xlu0 %562
    %564 = vadd.xlane.f32.xlu0 %v561
    %v565 = vpop.xlane.xlu0 %564
    %566 = vadd.xlane.f32.xlu0 %v531
    %v567 = vpop.xlane.xlu0 %566
    %568 = vadd.xlane.f32.xlu0 %v535
    %v569 = vpop.xlane.xlu0 %568
    %v570 = vmul.f32 %v531, %v531
    %v571 = vmul.f32 %v535, %v535
    %572 = vadd.xlane.f32.xlu0 %v570
    %v573 = vpop.xlane.xlu0 %572
    %574 = vadd.xlane.f32.xlu0 %v571
    %v575 = vpop.xlane.xlu0 %574
    %vm576 = vcmask 7168
    %v577 = vsel %vm576, %v537, %v547
    %v578 = vsel %vm576, %v539, %v549
    %vm579 = vcmask 15360
    %v580 = vsel %vm579, %v577, %v557
    %v581 = vsel %vm579, %v578, %v559
    %vm582 = vcmask 23552
    %v583 = vsel %vm582, %v580, %v567
    %v584 = vsel %vm582, %v581, %v569
    %v585 = vsel %vm576, %v543, %v553
    %v586 = vsel %vm576, %v545, %v555
    %v587 = vsel %vm579, %v585, %v563
    %v588 = vsel %vm579, %v586, %v565
    %v589 = vsel %vm582, %v587, %v573
    %v590 = vsel %vm582, %v588, %v575
    %vm591 = vcmask 31744
    %v592 = vsel %vm591, %v583, 0.0
    %593 = vadd.xlane.f32.xlu0 %v592
    %v594 = vpop.xlane.xlu0 %593
    %v595 = vsel %vm591, %v584, 0.0
    %596 = vadd.xlane.f32.xlu0 %v595
    %v597 = vpop.xlane.xlu0 %596
    %v598 = vmul.f32 %v594, 0.0038461538
    %v599 = vmul.f32 %v597, 0.0038461538
    %v600 = vsel %vm591, %v589, 0.0
    %601 = vadd.xlane.f32.xlu0 %v600
    %v602 = vpop.xlane.xlu0 %601
    %v603 = vsel %vm591, %v590, 0.0
    %604 = vadd.xlane.f32.xlu0 %v603
    %v605 = vpop.xlane.xlu0 %604
    %v606 = vmul.f32 %v602, 0.0038461538
    %v607 = vmul.f32 %v605, 0.0038461538
    %v608 = vmul.f32 %v598, %v598
    %v609 = vmul.f32 %v599, %v599
    %v610 = vsub.f32 %v606, %v608
    %v611 = vsub.f32 %v607, %v609
    %v612 = vadd.f32 %v610, 1e-05
    %v613 = vadd.f32 %v611, 1e-05
    %v614 = vrsqrt.pop %v612
    %v615 = vrsqrt.pop %v613
    %v616 = vld [vmem:[%s4] sm:$0xff]
    %v617 = vld [vmem:[%s4 + $0x8] sm:$0xff]
    %v618 = vmul.f32 %v614, %v616
    %v619 = vmul.f32 %v615, %v617
    %v620 = vld [vmem:[%s5] sm:$0xff]
    %v621 = vld [vmem:[%s5 + $0x8] sm:$0xff]
    %v622 = vmul.f32 %v598, %v618
    %v623 = vmul.f32 %v599, %v619
    %v624 = vsub.f32 %v620, %v622
    %v625 = vsub.f32 %v621, %v623
    %v626 = vmul.f32 %v583, 0.015384615
    %v627 = vmul.f32 %v584, 0.015384615
    %629 = vset.pattern.permute.xlu0 0
    %630 = vperm.xlu0 %629, %v618
    %v631 = vpop.permute.xlu0 %630
    %634 = vset.pattern.permute.xlu0 0
    %635 = vperm.xlu0 %634, %v619
    %v636 = vpop.permute.xlu0 %635
    %v638 = vmul.f32 %v626, %v631
    %v639 = vmul.f32 %v627, %v636
    %641 = vset.pattern.permute.xlu0 0
    %642 = vperm.xlu0 %641, %v624
    %v643 = vpop.permute.xlu0 %642
    %646 = vset.pattern.permute.xlu0 0
    %647 = vperm.xlu0 %646, %v625
    %v648 = vpop.permute.xlu0 %647
    %v650 = vadd.f32 %v638, %v643
    %v651 = vadd.f32 %v639, %v648
    %v652 = vld [vmem:[%s6] sm:$0x3]
    %v653 = vld [vmem:[%s7] sm:$0x3]
    %655 = vset.pattern.permute.xlu0 0
    %656 = vperm.xlu0 %655, %v653
    %v657 = vpop.permute.xlu0 %656
    %vm659 = vcmask 130048
    %v661 = vsel %vm659, %v652, 0
    %663 = vmatprep.subr.mxu0 0.0
    %664 = vmatpush1.msra.mxu0 0.0
    %665 = vmatprep.subr.mxu0 0.0
    %666 = vmatpush1.msra.mxu0 0.0
    %667 = vmatprep.subr.mxu0 0.0
    %668 = vmatpush1.msra.mxu0 0.0
    %669 = vmatprep.subr.mxu0 0.0
    %670 = vmatpush1.msra.mxu0 0.0
    %671 = vmatprep.subr.mxu0 0.0
    %672 = vmatpush1.msra.mxu0 0.0
    %673 = vmatprep.subr.mxu0 0.0
    %674 = vmatpush1.msra.mxu0 0.0
    %675 = vmatprep.subr.mxu0 0.0
    %676 = vmatpush1.msra.mxu0 0.0
    %677 = vmatprep.subr.mxu0 0.0
    %678 = vmatpush1.msra.mxu0 0.0
    %679 = vmatprep.subr.mxu0 0.0
    %680 = vmatpush1.msra.mxu0 0.0
    %681 = vmatprep.subr.mxu0 0.0
    %682 = vmatpush1.msra.mxu0 0.0
    %683 = vmatprep.subr.mxu0 0.0
    %684 = vmatpush1.msra.mxu0 0.0
    %685 = vmatprep.subr.mxu0 0.0
    %686 = vmatpush1.msra.mxu0 0.0
    %687 = vmatprep.subr.mxu0 0.0
    %688 = vmatpush1.msra.mxu0 0.0
    %689 = vmatprep.subr.mxu0 0.0
    %690 = vmatpush1.msra.mxu0 0.0
    %691 = vmatprep.subr.mxu0 0.0
    %692 = vmatpush1.msra.mxu0 %v651
    %693 = vmatprep.subr.mxu0 0.0
    %694 = vmatpush1.msra.mxu0 %v650
    %695 = vmatprep.subr.mxu0 0.0
    %696 = vmatpush2.msra.mxu0 0.0
    %697 = vmatprep.subr.mxu0 0.0
    %698 = vmatpush2.msra.mxu0 0.0
    %699 = vmatprep.subr.mxu0 0.0
    %700 = vmatpush2.msra.mxu0 0.0
    %701 = vmatprep.subr.mxu0 0.0
    %702 = vmatpush2.msra.mxu0 0.0
    %703 = vmatprep.subr.mxu0 0.0
    %704 = vmatpush2.msra.mxu0 0.0
    %705 = vmatprep.subr.mxu0 0.0
    %706 = vmatpush2.msra.mxu0 0.0
    %707 = vmatprep.subr.mxu0 0.0
    %708 = vmatpush2.msra.mxu0 0.0
    %709 = vmatprep.subr.mxu0 0.0
    %710 = vmatpush2.msra.mxu0 0.0
    %711 = vmatprep.subr.mxu0 0.0
    %712 = vmatpush2.msra.mxu0 0.0
    %713 = vmatprep.subr.mxu0 0.0
    %714 = vmatpush2.msra.mxu0 0.0
    %715 = vmatprep.subr.mxu0 0.0
    %716 = vmatpush2.msra.mxu0 0.0
    %717 = vmatprep.subr.mxu0 0.0
    %718 = vmatpush2.msra.mxu0 0.0
    %719 = vmatprep.subr.mxu0 0.0
    %720 = vmatpush2.msra.mxu0 0.0
    %721 = vmatprep.subr.mxu0 0.0
    %722 = vmatpush2.msra.mxu0 0.0
    %723 = vmatprep.subr.mxu0 0.0
    %724 = vmatpush2.msra.mxu0 0.0
    %725 = vmatprep.subr.mxu0 0.0
    %726 = vmatpush2.msra.mxu0 0.0
    %727 = vmatprep.mubr.f32.mxu0 0.0
    %728 = vmatmul.mubr.f32.gmra.mxu0 %v661
    %v729 = vpop.f32.mrf.mxu0
    %v730 = vadd.f32 %v657, %v729
    %v731 = vpop.f32.mrf.mxu0
    %732 = vdwg.mxu0
    %vm733 = vcmask 25600
    %v734 = vsel %vm733, %v730, -inf
    %v735 = vrot.slane %v734, 4
    %v736 = vmax.f32 %v734, %v735
    %v737 = vrot.slane %v736, 2
    %v738 = vmax.f32 %v736, %v737
    %v739 = vrot.slane %v738, 1
    %v740 = vmax.f32 %v738, %v739
    %v741 = vsub.f32 %v730, %v740
    %v742 = vmul.f32 %v741, 1.442695
    %v743 = vpow.pop %v742
    %v744 = vsel %vm733, %v743, 0.0
    %v745 = vrot.slane %v744, 4
    %v746 = vadd.f32 %v744, %v745
    %v747 = vrot.slane %v746, 2
    %v748 = vadd.f32 %v746, %v747
    %v749 = vrot.slane %v748, 1
    %v750 = vadd.f32 %v748, %v749
    %v751 = vrcp.pop %v750
    %v752 = vmul.f32 %v743, %v751
    %753 = vst.msk [vmem:[#allocation3] sm:$0x3] %vm733, %v752
    // Predicated region
    $region34: #{tpu_custom_call.1} parent=1 // pred_check
      _
    $region35: #{tpu_custom_call.1} parent=1 // pred_check_branch
      %755 = sbr.rel (0) target = $region37
    $region36: #{tpu_custom_call.1} parent=1 // pred_region
      %s757 = ssub.s32 32, 32
      %758 = vsyncadd [#allocation4], %s757
      %s760 = sshll.u32 [#allocation3], 4
      %s761 = int_to_ptr.vmem [resolvable:$true] %s760
      %763 = dma.vmem_to_hbm [thread:$0]  %s761, 32, %s8, [#allocation4]
    $region37: #{tpu_custom_call.1} parent=1 // pred_fallthru
      _
    // Predicated region
    $region38: #{tpu_custom_call.1} parent=1 // pred_check
      _
    $region39: #{tpu_custom_call.1} parent=1 // pred_check_branch
      %765 = sbr.rel (0) target = $region41
    $region40: #{tpu_custom_call.1} parent=1 // pred_region
      %766 = dma.done [#allocation4], 32
    $region41: #{tpu_custom_call.1} parent=1 // pred_fallthru
      _
    %767 = vsyncpa [#allocation4], 1

</llo_original>
